<compile_context>
chip_gen: v6e
topology: v6e:2x2x1
jax: 0.10.0
libtpu: 0.0.40
codegen_flags: <defaults>
</compile_context>

<pallas_src>
import functools
import math

import jax
import jax.numpy as jnp
from jax.experimental import pallas as pl
from jax.experimental.pallas import tpu as pltpu


def _round_up(x, m):
    return ((x + m - 1) // m) * m


def _gather_kernel(ids_smem, table_hbm, out_ref, row_buf, sems, *, denom, tb):
    # ids_smem:  (ntok_pad,)        int32, SMEM (scalar prefetch)
    # table_hbm: (vocab, d_model)   f32,   HBM (pl.ANY -- never staged whole)
    # out_ref:   (tb, d_model)      f32,   VMEM output block for this tile
    # row_buf:   (tb, d_model)      f32,   VMEM gather destination (scratch)
    # sems:      (tb,)              DMA semaphores, one per in-flight row copy
    i = pl.program_id(0)
    base = i * tb
    small = tb <= 32  # unroll short DMA-issue loops for LLO scheduling

    # Issue all row-gather DMAs for this token tile; they run concurrently.
    @pl.loop(0, tb, unroll=small)
    def _(t):
        row = ids_smem[base + t]
        pltpu.make_async_copy(
            table_hbm.at[pl.ds(row, 1), :],
            row_buf.at[pl.ds(t, 1), :],
            sems.at[t],
        ).start()

    # Wait for every gathered row to land in VMEM.
    @pl.loop(0, tb, unroll=small)
    def _(t):
        pltpu.make_async_copy(
            table_hbm.at[pl.ds(0, 1), :],
            row_buf.at[pl.ds(t, 1), :],
            sems.at[t],
        ).wait()

    # Exactly the PyTorch semantics: lut(x) / sqrt(d_model).
    out_ref[...] = row_buf[...] / denom


def ts_embedding(ids, table, *, tb=None):
    """Pallas equivalent of TSEmbedding.forward: table[ids] / sqrt(d_model)."""
    B, S = ids.shape
    vocab, d_model = table.shape
    ntok = B * S

    # Token tile: big enough to amortize per-grid-step overhead, capped so the
    # semaphore array / scratch stay small.  Must be a multiple of 8 (sublane).
    if tb is None:
        tb = min(256, _round_up(ntok, 8))
    tb = max(8, _round_up(tb, 8))
    ntok_pad = _round_up(ntok, tb)
    n_tiles = ntok_pad // tb

    # Ids go to SMEM via scalar prefetch.  Clamp to keep the row DMAs in
    # bounds (PyTorch would raise on out-of-range ids; we cannot raise from a
    # kernel, so we clamp).  Padded tokens read row 0 and are sliced off.
    ids_flat = jnp.clip(ids.reshape(-1).astype(jnp.int32), 0, vocab - 1)
    if ntok_pad != ntok:
        ids_flat = jnp.pad(ids_flat, (0, ntok_pad - ntok))

    denom = math.sqrt(d_model)

    out = pl.pallas_call(
        functools.partial(_gather_kernel, denom=denom, tb=tb),
        out_shape=jax.ShapeDtypeStruct((ntok_pad, d_model), table.dtype),
        grid_spec=pltpu.PrefetchScalarGridSpec(
            num_scalar_prefetch=1,
            grid=(n_tiles,),
            in_specs=[
                pl.BlockSpec(memory_space=pl.ANY),          # table stays in HBM
            ],
            out_specs=pl.BlockSpec((tb, d_model), lambda i, ids_ref: (i, 0)),
            scratch_shapes=[
                pltpu.VMEM((tb, d_model), table.dtype),      # gather buffer
                pltpu.SemaphoreType.DMA((tb,)),              # per-row DMA sems
            ],
        ),
        compiler_params=pltpu.CompilerParams(
            dimension_semantics=("parallel",)),
    )(ids_flat, table)

    return out[:ntok].reshape(B, S, d_model)


if __name__ == "__main__":
    vocab_size = 64
    d_model = 128
    B, S = 2, 8

    key = jax.random.PRNGKey(0)
    k_table, k_ids = jax.random.split(key)

    # nn.Embedding default init: weight ~ N(0, 1)
    table = jax.random.normal(k_table, (vocab_size, d_model), dtype=jnp.float32)
    ids = jax.random.randint(k_ids, (B, S), 0, vocab_size, dtype=jnp.int32)

    out = ts_embedding(ids, table)
    out = jax.block_until_ready(out)

    # Reference (plain JAX) check of the forward semantics.
    ref = table[ids] / math.sqrt(d_model)
    assert out.shape == (B, S, d_model)
    assert jnp.allclose(out, ref, atol=1e-5, rtol=1e-5)

    print("KERNEL_OK")
</pallas_src>

<mosaic_0001>
module attributes {stable_mosaic.version = 11 : i64} {
  func.func @_gather_kernel(%arg0: i32, %arg1: memref<16xi32, #tpu.memory_space<smem>>, %arg2: memref<64x128xf32, #tpu.memory_space<any>>, %arg3: memref<16x128xf32, #tpu.memory_space<vmem>>, %arg4: memref<16x128xf32, #tpu.memory_space<vmem>>, %arg5: memref<16x!tpu.dma_semaphore, #tpu.memory_space<semaphore_mem>>) attributes {dimension_semantics = [#tpu.dimension_semantics<parallel>], iteration_bounds = array<i64: 1>, scalar_prefetch = 1 : i64, scratch_operands = 2 : i64, tpu.core_type = #tpu.core_type<tc>, window_params = [{}, {transform_indices = @transform_1, window_bounds = array<i64: 16, 128>}]} {
    %c16_i32 = arith.constant 16 : i32
    %0 = arith.muli %arg0, %c16_i32 : i32
    %c0_i32 = arith.constant 0 : i32
    %c1_i32 = arith.constant 1 : i32
    %1 = arith.muli %c0_i32, %c1_i32 : i32
    %c0_i32_0 = arith.constant 0 : i32
    %2 = arith.addi %c0_i32_0, %1 : i32
    %3 = arith.addi %0, %2 : i32
    %4 = arith.index_cast %3 : i32 to index
    %5 = memref.load %arg1[%4] : memref<16xi32, #tpu.memory_space<smem>>
    %c0_i32_1 = arith.constant 0 : i32
    %6 = tpu.memref_slice %arg2[%5, %c0_i32_1] : memref<64x128xf32, #tpu.memory_space<any>> -> memref<1x128xf32, #tpu.memory_space<any>>
    %c0_i32_2 = arith.constant 0 : i32
    %7 = tpu.memref_slice %arg4[%2, %c0_i32_2] : memref<16x128xf32, #tpu.memory_space<vmem>> -> memref<1x128xf32, #tpu.memory_space<vmem>>
    %8 = tpu.memref_slice %arg5[%2] : memref<16x!tpu.dma_semaphore, #tpu.memory_space<semaphore_mem>> -> memref<1x!tpu.dma_semaphore, #tpu.memory_space<semaphore_mem>>
    %9 = tpu.memref_squeeze %8 : memref<1x!tpu.dma_semaphore, #tpu.memory_space<semaphore_mem>> -> memref<!tpu.dma_semaphore, #tpu.memory_space<semaphore_mem>>
    tpu.enqueue_dma source(%6 : memref<1x128xf32, #tpu.memory_space<any>>) target(%7 : memref<1x128xf32, #tpu.memory_space<vmem>>) target_semaphore(%9 : memref<!tpu.dma_semaphore, #tpu.memory_space<semaphore_mem>>)
    %c1_i32_3 = arith.constant 1 : i32
    %c1_i32_4 = arith.constant 1 : i32
    %10 = arith.muli %c1_i32_3, %c1_i32_4 : i32
    %c0_i32_5 = arith.constant 0 : i32
    %11 = arith.addi %c0_i32_5, %10 : i32
    %12 = arith.addi %0, %11 : i32
    %13 = arith.index_cast %12 : i32 to index
    %14 = memref.load %arg1[%13] : memref<16xi32, #tpu.memory_space<smem>>
    %c0_i32_6 = arith.constant 0 : i32
    %15 = tpu.memref_slice %arg2[%14, %c0_i32_6] : memref<64x128xf32, #tpu.memory_space<any>> -> memref<1x128xf32, #tpu.memory_space<any>>
    %c0_i32_7 = arith.constant 0 : i32
    %16 = tpu.memref_slice %arg4[%11, %c0_i32_7] : memref<16x128xf32, #tpu.memory_space<vmem>> -> memref<1x128xf32, #tpu.memory_space<vmem>>
    %17 = tpu.memref_slice %arg5[%11] : memref<16x!tpu.dma_semaphore, #tpu.memory_space<semaphore_mem>> -> memref<1x!tpu.dma_semaphore, #tpu.memory_space<semaphore_mem>>
    %18 = tpu.memref_squeeze %17 : memref<1x!tpu.dma_semaphore, #tpu.memory_space<semaphore_mem>> -> memref<!tpu.dma_semaphore, #tpu.memory_space<semaphore_mem>>
    tpu.enqueue_dma source(%15 : memref<1x128xf32, #tpu.memory_space<any>>) target(%16 : memref<1x128xf32, #tpu.memory_space<vmem>>) target_semaphore(%18 : memref<!tpu.dma_semaphore, #tpu.memory_space<semaphore_mem>>)
    %c2_i32 = arith.constant 2 : i32
    %c1_i32_8 = arith.constant 1 : i32
    %19 = arith.muli %c2_i32, %c1_i32_8 : i32
    %c0_i32_9 = arith.constant 0 : i32
    %20 = arith.addi %c0_i32_9, %19 : i32
    %21 = arith.addi %0, %20 : i32
    %22 = arith.index_cast %21 : i32 to index
    %23 = memref.load %arg1[%22] : memref<16xi32, #tpu.memory_space<smem>>
    %c0_i32_10 = arith.constant 0 : i32
    %24 = tpu.memref_slice %arg2[%23, %c0_i32_10] : memref<64x128xf32, #tpu.memory_space<any>> -> memref<1x128xf32, #tpu.memory_space<any>>
    %c0_i32_11 = arith.constant 0 : i32
    %25 = tpu.memref_slice %arg4[%20, %c0_i32_11] : memref<16x128xf32, #tpu.memory_space<vmem>> -> memref<1x128xf32, #tpu.memory_space<vmem>>
    %26 = tpu.memref_slice %arg5[%20] : memref<16x!tpu.dma_semaphore, #tpu.memory_space<semaphore_mem>> -> memref<1x!tpu.dma_semaphore, #tpu.memory_space<semaphore_mem>>
    %27 = tpu.memref_squeeze %26 : memref<1x!tpu.dma_semaphore, #tpu.memory_space<semaphore_mem>> -> memref<!tpu.dma_semaphore, #tpu.memory_space<semaphore_mem>>
    tpu.enqueue_dma source(%24 : memref<1x128xf32, #tpu.memory_space<any>>) target(%25 : memref<1x128xf32, #tpu.memory_space<vmem>>) target_semaphore(%27 : memref<!tpu.dma_semaphore, #tpu.memory_space<semaphore_mem>>)
    %c3_i32 = arith.constant 3 : i32
    %c1_i32_12 = arith.constant 1 : i32
    %28 = arith.muli %c3_i32, %c1_i32_12 : i32
    %c0_i32_13 = arith.constant 0 : i32
    %29 = arith.addi %c0_i32_13, %28 : i32
    %30 = arith.addi %0, %29 : i32
    %31 = arith.index_cast %30 : i32 to index
    %32 = memref.load %arg1[%31] : memref<16xi32, #tpu.memory_space<smem>>
    %c0_i32_14 = arith.constant 0 : i32
    %33 = tpu.memref_slice %arg2[%32, %c0_i32_14] : memref<64x128xf32, #tpu.memory_space<any>> -> memref<1x128xf32, #tpu.memory_space<any>>
    %c0_i32_15 = arith.constant 0 : i32
    %34 = tpu.memref_slice %arg4[%29, %c0_i32_15] : memref<16x128xf32, #tpu.memory_space<vmem>> -> memref<1x128xf32, #tpu.memory_space<vmem>>
    %35 = tpu.memref_slice %arg5[%29] : memref<16x!tpu.dma_semaphore, #tpu.memory_space<semaphore_mem>> -> memref<1x!tpu.dma_semaphore, #tpu.memory_space<semaphore_mem>>
    %36 = tpu.memref_squeeze %35 : memref<1x!tpu.dma_semaphore, #tpu.memory_space<semaphore_mem>> -> memref<!tpu.dma_semaphore, #tpu.memory_space<semaphore_mem>>
    tpu.enqueue_dma source(%33 : memref<1x128xf32, #tpu.memory_space<any>>) target(%34 : memref<1x128xf32, #tpu.memory_space<vmem>>) target_semaphore(%36 : memref<!tpu.dma_semaphore, #tpu.memory_space<semaphore_mem>>)
    %c4_i32 = arith.constant 4 : i32
    %c1_i32_16 = arith.constant 1 : i32
    %37 = arith.muli %c4_i32, %c1_i32_16 : i32
    %c0_i32_17 = arith.constant 0 : i32
    %38 = arith.addi %c0_i32_17, %37 : i32
    %39 = arith.addi %0, %38 : i32
    %40 = arith.index_cast %39 : i32 to index
    %41 = memref.load %arg1[%40] : memref<16xi32, #tpu.memory_space<smem>>
    %c0_i32_18 = arith.constant 0 : i32
    %42 = tpu.memref_slice %arg2[%41, %c0_i32_18] : memref<64x128xf32, #tpu.memory_space<any>> -> memref<1x128xf32, #tpu.memory_space<any>>
    %c0_i32_19 = arith.constant 0 : i32
    %43 = tpu.memref_slice %arg4[%38, %c0_i32_19] : memref<16x128xf32, #tpu.memory_space<vmem>> -> memref<1x128xf32, #tpu.memory_space<vmem>>
    %44 = tpu.memref_slice %arg5[%38] : memref<16x!tpu.dma_semaphore, #tpu.memory_space<semaphore_mem>> -> memref<1x!tpu.dma_semaphore, #tpu.memory_space<semaphore_mem>>
    %45 = tpu.memref_squeeze %44 : memref<1x!tpu.dma_semaphore, #tpu.memory_space<semaphore_mem>> -> memref<!tpu.dma_semaphore, #tpu.memory_space<semaphore_mem>>
    tpu.enqueue_dma source(%42 : memref<1x128xf32, #tpu.memory_space<any>>) target(%43 : memref<1x128xf32, #tpu.memory_space<vmem>>) target_semaphore(%45 : memref<!tpu.dma_semaphore, #tpu.memory_space<semaphore_mem>>)
    %c5_i32 = arith.constant 5 : i32
    %c1_i32_20 = arith.constant 1 : i32
    %46 = arith.muli %c5_i32, %c1_i32_20 : i32
    %c0_i32_21 = arith.constant 0 : i32
    %47 = arith.addi %c0_i32_21, %46 : i32
    %48 = arith.addi %0, %47 : i32
    %49 = arith.index_cast %48 : i32 to index
    %50 = memref.load %arg1[%49] : memref<16xi32, #tpu.memory_space<smem>>
    %c0_i32_22 = arith.constant 0 : i32
    %51 = tpu.memref_slice %arg2[%50, %c0_i32_22] : memref<64x128xf32, #tpu.memory_space<any>> -> memref<1x128xf32, #tpu.memory_space<any>>
    %c0_i32_23 = arith.constant 0 : i32
    %52 = tpu.memref_slice %arg4[%47, %c0_i32_23] : memref<16x128xf32, #tpu.memory_space<vmem>> -> memref<1x128xf32, #tpu.memory_space<vmem>>
    %53 = tpu.memref_slice %arg5[%47] : memref<16x!tpu.dma_semaphore, #tpu.memory_space<semaphore_mem>> -> memref<1x!tpu.dma_semaphore, #tpu.memory_space<semaphore_mem>>
    %54 = tpu.memref_squeeze %53 : memref<1x!tpu.dma_semaphore, #tpu.memory_space<semaphore_mem>> -> memref<!tpu.dma_semaphore, #tpu.memory_space<semaphore_mem>>
    tpu.enqueue_dma source(%51 : memref<1x128xf32, #tpu.memory_space<any>>) target(%52 : memref<1x128xf32, #tpu.memory_space<vmem>>) target_semaphore(%54 : memref<!tpu.dma_semaphore, #tpu.memory_space<semaphore_mem>>)
    %c6_i32 = arith.constant 6 : i32
    %c1_i32_24 = arith.constant 1 : i32
    %55 = arith.muli %c6_i32, %c1_i32_24 : i32
    %c0_i32_25 = arith.constant 0 : i32
    %56 = arith.addi %c0_i32_25, %55 : i32
    %57 = arith.addi %0, %56 : i32
    %58 = arith.index_cast %57 : i32 to index
    %59 = memref.load %arg1[%58] : memref<16xi32, #tpu.memory_space<smem>>
    %c0_i32_26 = arith.constant 0 : i32
    %60 = tpu.memref_slice %arg2[%59, %c0_i32_26] : memref<64x128xf32, #tpu.memory_space<any>> -> memref<1x128xf32, #tpu.memory_space<any>>
    %c0_i32_27 = arith.constant 0 : i32
    %61 = tpu.memref_slice %arg4[%56, %c0_i32_27] : memref<16x128xf32, #tpu.memory_space<vmem>> -> memref<1x128xf32, #tpu.memory_space<vmem>>
    %62 = tpu.memref_slice %arg5[%56] : memref<16x!tpu.dma_semaphore, #tpu.memory_space<semaphore_mem>> -> memref<1x!tpu.dma_semaphore, #tpu.memory_space<semaphore_mem>>
    %63 = tpu.memref_squeeze %62 : memref<1x!tpu.dma_semaphore, #tpu.memory_space<semaphore_mem>> -> memref<!tpu.dma_semaphore, #tpu.memory_space<semaphore_mem>>
    tpu.enqueue_dma source(%60 : memref<1x128xf32, #tpu.memory_space<any>>) target(%61 : memref<1x128xf32, #tpu.memory_space<vmem>>) target_semaphore(%63 : memref<!tpu.dma_semaphore, #tpu.memory_space<semaphore_mem>>)
    %c7_i32 = arith.constant 7 : i32
    %c1_i32_28 = arith.constant 1 : i32
    %64 = arith.muli %c7_i32, %c1_i32_28 : i32
    %c0_i32_29 = arith.constant 0 : i32
    %65 = arith.addi %c0_i32_29, %64 : i32
    %66 = arith.addi %0, %65 : i32
    %67 = arith.index_cast %66 : i32 to index
    %68 = memref.load %arg1[%67] : memref<16xi32, #tpu.memory_space<smem>>
    %c0_i32_30 = arith.constant 0 : i32
    %69 = tpu.memref_slice %arg2[%68, %c0_i32_30] : memref<64x128xf32, #tpu.memory_space<any>> -> memref<1x128xf32, #tpu.memory_space<any>>
    %c0_i32_31 = arith.constant 0 : i32
    %70 = tpu.memref_slice %arg4[%65, %c0_i32_31] : memref<16x128xf32, #tpu.memory_space<vmem>> -> memref<1x128xf32, #tpu.memory_space<vmem>>
    %71 = tpu.memref_slice %arg5[%65] : memref<16x!tpu.dma_semaphore, #tpu.memory_space<semaphore_mem>> -> memref<1x!tpu.dma_semaphore, #tpu.memory_space<semaphore_mem>>
    %72 = tpu.memref_squeeze %71 : memref<1x!tpu.dma_semaphore, #tpu.memory_space<semaphore_mem>> -> memref<!tpu.dma_semaphore, #tpu.memory_space<semaphore_mem>>
    tpu.enqueue_dma source(%69 : memref<1x128xf32, #tpu.memory_space<any>>) target(%70 : memref<1x128xf32, #tpu.memory_space<vmem>>) target_semaphore(%72 : memref<!tpu.dma_semaphore, #tpu.memory_space<semaphore_mem>>)
    %c8_i32 = arith.constant 8 : i32
    %c1_i32_32 = arith.constant 1 : i32
    %73 = arith.muli %c8_i32, %c1_i32_32 : i32
    %c0_i32_33 = arith.constant 0 : i32
    %74 = arith.addi %c0_i32_33, %73 : i32
    %75 = arith.addi %0, %74 : i32
    %76 = arith.index_cast %75 : i32 to index
    %77 = memref.load %arg1[%76] : memref<16xi32, #tpu.memory_space<smem>>
    %c0_i32_34 = arith.constant 0 : i32
    %78 = tpu.memref_slice %arg2[%77, %c0_i32_34] : memref<64x128xf32, #tpu.memory_space<any>> -> memref<1x128xf32, #tpu.memory_space<any>>
    %c0_i32_35 = arith.constant 0 : i32
    %79 = tpu.memref_slice %arg4[%74, %c0_i32_35] : memref<16x128xf32, #tpu.memory_space<vmem>> -> memref<1x128xf32, #tpu.memory_space<vmem>>
    %80 = tpu.memref_slice %arg5[%74] : memref<16x!tpu.dma_semaphore, #tpu.memory_space<semaphore_mem>> -> memref<1x!tpu.dma_semaphore, #tpu.memory_space<semaphore_mem>>
    %81 = tpu.memref_squeeze %80 : memref<1x!tpu.dma_semaphore, #tpu.memory_space<semaphore_mem>> -> memref<!tpu.dma_semaphore, #tpu.memory_space<semaphore_mem>>
    tpu.enqueue_dma source(%78 : memref<1x128xf32, #tpu.memory_space<any>>) target(%79 : memref<1x128xf32, #tpu.memory_space<vmem>>) target_semaphore(%81 : memref<!tpu.dma_semaphore, #tpu.memory_space<semaphore_mem>>)
    %c9_i32 = arith.constant 9 : i32
    %c1_i32_36 = arith.constant 1 : i32
    %82 = arith.muli %c9_i32, %c1_i32_36 : i32
    %c0_i32_37 = arith.constant 0 : i32
    %83 = arith.addi %c0_i32_37, %82 : i32
    %84 = arith.addi %0, %83 : i32
    %85 = arith.index_cast %84 : i32 to index
    %86 = memref.load %arg1[%85] : memref<16xi32, #tpu.memory_space<smem>>
    %c0_i32_38 = arith.constant 0 : i32
    %87 = tpu.memref_slice %arg2[%86, %c0_i32_38] : memref<64x128xf32, #tpu.memory_space<any>> -> memref<1x128xf32, #tpu.memory_space<any>>
    %c0_i32_39 = arith.constant 0 : i32
    %88 = tpu.memref_slice %arg4[%83, %c0_i32_39] : memref<16x128xf32, #tpu.memory_space<vmem>> -> memref<1x128xf32, #tpu.memory_space<vmem>>
    %89 = tpu.memref_slice %arg5[%83] : memref<16x!tpu.dma_semaphore, #tpu.memory_space<semaphore_mem>> -> memref<1x!tpu.dma_semaphore, #tpu.memory_space<semaphore_mem>>
    %90 = tpu.memref_squeeze %89 : memref<1x!tpu.dma_semaphore, #tpu.memory_space<semaphore_mem>> -> memref<!tpu.dma_semaphore, #tpu.memory_space<semaphore_mem>>
    tpu.enqueue_dma source(%87 : memref<1x128xf32, #tpu.memory_space<any>>) target(%88 : memref<1x128xf32, #tpu.memory_space<vmem>>) target_semaphore(%90 : memref<!tpu.dma_semaphore, #tpu.memory_space<semaphore_mem>>)
    %c10_i32 = arith.constant 10 : i32
    %c1_i32_40 = arith.constant 1 : i32
    %91 = arith.muli %c10_i32, %c1_i32_40 : i32
    %c0_i32_41 = arith.constant 0 : i32
    %92 = arith.addi %c0_i32_41, %91 : i32
    %93 = arith.addi %0, %92 : i32
    %94 = arith.index_cast %93 : i32 to index
    %95 = memref.load %arg1[%94] : memref<16xi32, #tpu.memory_space<smem>>
    %c0_i32_42 = arith.constant 0 : i32
    %96 = tpu.memref_slice %arg2[%95, %c0_i32_42] : memref<64x128xf32, #tpu.memory_space<any>> -> memref<1x128xf32, #tpu.memory_space<any>>
    %c0_i32_43 = arith.constant 0 : i32
    %97 = tpu.memref_slice %arg4[%92, %c0_i32_43] : memref<16x128xf32, #tpu.memory_space<vmem>> -> memref<1x128xf32, #tpu.memory_space<vmem>>
    %98 = tpu.memref_slice %arg5[%92] : memref<16x!tpu.dma_semaphore, #tpu.memory_space<semaphore_mem>> -> memref<1x!tpu.dma_semaphore, #tpu.memory_space<semaphore_mem>>
    %99 = tpu.memref_squeeze %98 : memref<1x!tpu.dma_semaphore, #tpu.memory_space<semaphore_mem>> -> memref<!tpu.dma_semaphore, #tpu.memory_space<semaphore_mem>>
    tpu.enqueue_dma source(%96 : memref<1x128xf32, #tpu.memory_space<any>>) target(%97 : memref<1x128xf32, #tpu.memory_space<vmem>>) target_semaphore(%99 : memref<!tpu.dma_semaphore, #tpu.memory_space<semaphore_mem>>)
    %c11_i32 = arith.constant 11 : i32
    %c1_i32_44 = arith.constant 1 : i32
    %100 = arith.muli %c11_i32, %c1_i32_44 : i32
    %c0_i32_45 = arith.constant 0 : i32
    %101 = arith.addi %c0_i32_45, %100 : i32
    %102 = arith.addi %0, %101 : i32
    %103 = arith.index_cast %102 : i32 to index
    %104 = memref.load %arg1[%103] : memref<16xi32, #tpu.memory_space<smem>>
    %c0_i32_46 = arith.constant 0 : i32
    %105 = tpu.memref_slice %arg2[%104, %c0_i32_46] : memref<64x128xf32, #tpu.memory_space<any>> -> memref<1x128xf32, #tpu.memory_space<any>>
    %c0_i32_47 = arith.constant 0 : i32
    %106 = tpu.memref_slice %arg4[%101, %c0_i32_47] : memref<16x128xf32, #tpu.memory_space<vmem>> -> memref<1x128xf32, #tpu.memory_space<vmem>>
    %107 = tpu.memref_slice %arg5[%101] : memref<16x!tpu.dma_semaphore, #tpu.memory_space<semaphore_mem>> -> memref<1x!tpu.dma_semaphore, #tpu.memory_space<semaphore_mem>>
    %108 = tpu.memref_squeeze %107 : memref<1x!tpu.dma_semaphore, #tpu.memory_space<semaphore_mem>> -> memref<!tpu.dma_semaphore, #tpu.memory_space<semaphore_mem>>
    tpu.enqueue_dma source(%105 : memref<1x128xf32, #tpu.memory_space<any>>) target(%106 : memref<1x128xf32, #tpu.memory_space<vmem>>) target_semaphore(%108 : memref<!tpu.dma_semaphore, #tpu.memory_space<semaphore_mem>>)
    %c12_i32 = arith.constant 12 : i32
    %c1_i32_48 = arith.constant 1 : i32
    %109 = arith.muli %c12_i32, %c1_i32_48 : i32
    %c0_i32_49 = arith.constant 0 : i32
    %110 = arith.addi %c0_i32_49, %109 : i32
    %111 = arith.addi %0, %110 : i32
    %112 = arith.index_cast %111 : i32 to index
    %113 = memref.load %arg1[%112] : memref<16xi32, #tpu.memory_space<smem>>
    %c0_i32_50 = arith.constant 0 : i32
    %114 = tpu.memref_slice %arg2[%113, %c0_i32_50] : memref<64x128xf32, #tpu.memory_space<any>> -> memref<1x128xf32, #tpu.memory_space<any>>
    %c0_i32_51 = arith.constant 0 : i32
    %115 = tpu.memref_slice %arg4[%110, %c0_i32_51] : memref<16x128xf32, #tpu.memory_space<vmem>> -> memref<1x128xf32, #tpu.memory_space<vmem>>
    %116 = tpu.memref_slice %arg5[%110] : memref<16x!tpu.dma_semaphore, #tpu.memory_space<semaphore_mem>> -> memref<1x!tpu.dma_semaphore, #tpu.memory_space<semaphore_mem>>
    %117 = tpu.memref_squeeze %116 : memref<1x!tpu.dma_semaphore, #tpu.memory_space<semaphore_mem>> -> memref<!tpu.dma_semaphore, #tpu.memory_space<semaphore_mem>>
    tpu.enqueue_dma source(%114 : memref<1x128xf32, #tpu.memory_space<any>>) target(%115 : memref<1x128xf32, #tpu.memory_space<vmem>>) target_semaphore(%117 : memref<!tpu.dma_semaphore, #tpu.memory_space<semaphore_mem>>)
    %c13_i32 = arith.constant 13 : i32
    %c1_i32_52 = arith.constant 1 : i32
    %118 = arith.muli %c13_i32, %c1_i32_52 : i32
    %c0_i32_53 = arith.constant 0 : i32
    %119 = arith.addi %c0_i32_53, %118 : i32
    %120 = arith.addi %0, %119 : i32
    %121 = arith.index_cast %120 : i32 to index
    %122 = memref.load %arg1[%121] : memref<16xi32, #tpu.memory_space<smem>>
    %c0_i32_54 = arith.constant 0 : i32
    %123 = tpu.memref_slice %arg2[%122, %c0_i32_54] : memref<64x128xf32, #tpu.memory_space<any>> -> memref<1x128xf32, #tpu.memory_space<any>>
    %c0_i32_55 = arith.constant 0 : i32
    %124 = tpu.memref_slice %arg4[%119, %c0_i32_55] : memref<16x128xf32, #tpu.memory_space<vmem>> -> memref<1x128xf32, #tpu.memory_space<vmem>>
    %125 = tpu.memref_slice %arg5[%119] : memref<16x!tpu.dma_semaphore, #tpu.memory_space<semaphore_mem>> -> memref<1x!tpu.dma_semaphore, #tpu.memory_space<semaphore_mem>>
    %126 = tpu.memref_squeeze %125 : memref<1x!tpu.dma_semaphore, #tpu.memory_space<semaphore_mem>> -> memref<!tpu.dma_semaphore, #tpu.memory_space<semaphore_mem>>
    tpu.enqueue_dma source(%123 : memref<1x128xf32, #tpu.memory_space<any>>) target(%124 : memref<1x128xf32, #tpu.memory_space<vmem>>) target_semaphore(%126 : memref<!tpu.dma_semaphore, #tpu.memory_space<semaphore_mem>>)
    %c14_i32 = arith.constant 14 : i32
    %c1_i32_56 = arith.constant 1 : i32
    %127 = arith.muli %c14_i32, %c1_i32_56 : i32
    %c0_i32_57 = arith.constant 0 : i32
    %128 = arith.addi %c0_i32_57, %127 : i32
    %129 = arith.addi %0, %128 : i32
    %130 = arith.index_cast %129 : i32 to index
    %131 = memref.load %arg1[%130] : memref<16xi32, #tpu.memory_space<smem>>
    %c0_i32_58 = arith.constant 0 : i32
    %132 = tpu.memref_slice %arg2[%131, %c0_i32_58] : memref<64x128xf32, #tpu.memory_space<any>> -> memref<1x128xf32, #tpu.memory_space<any>>
    %c0_i32_59 = arith.constant 0 : i32
    %133 = tpu.memref_slice %arg4[%128, %c0_i32_59] : memref<16x128xf32, #tpu.memory_space<vmem>> -> memref<1x128xf32, #tpu.memory_space<vmem>>
    %134 = tpu.memref_slice %arg5[%128] : memref<16x!tpu.dma_semaphore, #tpu.memory_space<semaphore_mem>> -> memref<1x!tpu.dma_semaphore, #tpu.memory_space<semaphore_mem>>
    %135 = tpu.memref_squeeze %134 : memref<1x!tpu.dma_semaphore, #tpu.memory_space<semaphore_mem>> -> memref<!tpu.dma_semaphore, #tpu.memory_space<semaphore_mem>>
    tpu.enqueue_dma source(%132 : memref<1x128xf32, #tpu.memory_space<any>>) target(%133 : memref<1x128xf32, #tpu.memory_space<vmem>>) target_semaphore(%135 : memref<!tpu.dma_semaphore, #tpu.memory_space<semaphore_mem>>)
    %c15_i32 = arith.constant 15 : i32
    %c1_i32_60 = arith.constant 1 : i32
    %136 = arith.muli %c15_i32, %c1_i32_60 : i32
    %c0_i32_61 = arith.constant 0 : i32
    %137 = arith.addi %c0_i32_61, %136 : i32
    %138 = arith.addi %0, %137 : i32
    %139 = arith.index_cast %138 : i32 to index
    %140 = memref.load %arg1[%139] : memref<16xi32, #tpu.memory_space<smem>>
    %c0_i32_62 = arith.constant 0 : i32
    %141 = tpu.memref_slice %arg2[%140, %c0_i32_62] : memref<64x128xf32, #tpu.memory_space<any>> -> memref<1x128xf32, #tpu.memory_space<any>>
    %c0_i32_63 = arith.constant 0 : i32
    %142 = tpu.memref_slice %arg4[%137, %c0_i32_63] : memref<16x128xf32, #tpu.memory_space<vmem>> -> memref<1x128xf32, #tpu.memory_space<vmem>>
    %143 = tpu.memref_slice %arg5[%137] : memref<16x!tpu.dma_semaphore, #tpu.memory_space<semaphore_mem>> -> memref<1x!tpu.dma_semaphore, #tpu.memory_space<semaphore_mem>>
    %144 = tpu.memref_squeeze %143 : memref<1x!tpu.dma_semaphore, #tpu.memory_space<semaphore_mem>> -> memref<!tpu.dma_semaphore, #tpu.memory_space<semaphore_mem>>
    tpu.enqueue_dma source(%141 : memref<1x128xf32, #tpu.memory_space<any>>) target(%142 : memref<1x128xf32, #tpu.memory_space<vmem>>) target_semaphore(%144 : memref<!tpu.dma_semaphore, #tpu.memory_space<semaphore_mem>>)
    %c16_i32_64 = arith.constant 16 : i32
    %c0_i32_65 = arith.constant 0 : i32
    %c1_i32_66 = arith.constant 1 : i32
    %145 = arith.muli %c0_i32_65, %c1_i32_66 : i32
    %c0_i32_67 = arith.constant 0 : i32
    %146 = arith.addi %c0_i32_67, %145 : i32
    %c0_i32_68 = arith.constant 0 : i32
    %c0_i32_69 = arith.constant 0 : i32
    %147 = tpu.memref_slice %arg2[%c0_i32_68, %c0_i32_69] : memref<64x128xf32, #tpu.memory_space<any>> -> memref<1x128xf32, #tpu.memory_space<any>>
    %c0_i32_70 = arith.constant 0 : i32
    %148 = tpu.memref_slice %arg4[%146, %c0_i32_70] : memref<16x128xf32, #tpu.memory_space<vmem>> -> memref<1x128xf32, #tpu.memory_space<vmem>>
    %149 = tpu.memref_slice %arg5[%146] : memref<16x!tpu.dma_semaphore, #tpu.memory_space<semaphore_mem>> -> memref<1x!tpu.dma_semaphore, #tpu.memory_space<semaphore_mem>>
    %150 = tpu.memref_squeeze %149 : memref<1x!tpu.dma_semaphore, #tpu.memory_space<semaphore_mem>> -> memref<!tpu.dma_semaphore, #tpu.memory_space<semaphore_mem>>
    tpu.wait_dma2 semaphore(%150 : memref<!tpu.dma_semaphore, #tpu.memory_space<semaphore_mem>>) src(%147 : memref<1x128xf32, #tpu.memory_space<any>>) dst(%148 : memref<1x128xf32, #tpu.memory_space<vmem>>)
    %c1_i32_71 = arith.constant 1 : i32
    %c1_i32_72 = arith.constant 1 : i32
    %151 = arith.muli %c1_i32_71, %c1_i32_72 : i32
    %c0_i32_73 = arith.constant 0 : i32
    %152 = arith.addi %c0_i32_73, %151 : i32
    %c0_i32_74 = arith.constant 0 : i32
    %c0_i32_75 = arith.constant 0 : i32
    %153 = tpu.memref_slice %arg2[%c0_i32_74, %c0_i32_75] : memref<64x128xf32, #tpu.memory_space<any>> -> memref<1x128xf32, #tpu.memory_space<any>>
    %c0_i32_76 = arith.constant 0 : i32
    %154 = tpu.memref_slice %arg4[%152, %c0_i32_76] : memref<16x128xf32, #tpu.memory_space<vmem>> -> memref<1x128xf32, #tpu.memory_space<vmem>>
    %155 = tpu.memref_slice %arg5[%152] : memref<16x!tpu.dma_semaphore, #tpu.memory_space<semaphore_mem>> -> memref<1x!tpu.dma_semaphore, #tpu.memory_space<semaphore_mem>>
    %156 = tpu.memref_squeeze %155 : memref<1x!tpu.dma_semaphore, #tpu.memory_space<semaphore_mem>> -> memref<!tpu.dma_semaphore, #tpu.memory_space<semaphore_mem>>
    tpu.wait_dma2 semaphore(%156 : memref<!tpu.dma_semaphore, #tpu.memory_space<semaphore_mem>>) src(%153 : memref<1x128xf32, #tpu.memory_space<any>>) dst(%154 : memref<1x128xf32, #tpu.memory_space<vmem>>)
    %c2_i32_77 = arith.constant 2 : i32
    %c1_i32_78 = arith.constant 1 : i32
    %157 = arith.muli %c2_i32_77, %c1_i32_78 : i32
    %c0_i32_79 = arith.constant 0 : i32
    %158 = arith.addi %c0_i32_79, %157 : i32
    %c0_i32_80 = arith.constant 0 : i32
    %c0_i32_81 = arith.constant 0 : i32
    %159 = tpu.memref_slice %arg2[%c0_i32_80, %c0_i32_81] : memref<64x128xf32, #tpu.memory_space<any>> -> memref<1x128xf32, #tpu.memory_space<any>>
    %c0_i32_82 = arith.constant 0 : i32
    %160 = tpu.memref_slice %arg4[%158, %c0_i32_82] : memref<16x128xf32, #tpu.memory_space<vmem>> -> memref<1x128xf32, #tpu.memory_space<vmem>>
    %161 = tpu.memref_slice %arg5[%158] : memref<16x!tpu.dma_semaphore, #tpu.memory_space<semaphore_mem>> -> memref<1x!tpu.dma_semaphore, #tpu.memory_space<semaphore_mem>>
    %162 = tpu.memref_squeeze %161 : memref<1x!tpu.dma_semaphore, #tpu.memory_space<semaphore_mem>> -> memref<!tpu.dma_semaphore, #tpu.memory_space<semaphore_mem>>
    tpu.wait_dma2 semaphore(%162 : memref<!tpu.dma_semaphore, #tpu.memory_space<semaphore_mem>>) src(%159 : memref<1x128xf32, #tpu.memory_space<any>>) dst(%160 : memref<1x128xf32, #tpu.memory_space<vmem>>)
    %c3_i32_83 = arith.constant 3 : i32
    %c1_i32_84 = arith.constant 1 : i32
    %163 = arith.muli %c3_i32_83, %c1_i32_84 : i32
    %c0_i32_85 = arith.constant 0 : i32
    %164 = arith.addi %c0_i32_85, %163 : i32
    %c0_i32_86 = arith.constant 0 : i32
    %c0_i32_87 = arith.constant 0 : i32
    %165 = tpu.memref_slice %arg2[%c0_i32_86, %c0_i32_87] : memref<64x128xf32, #tpu.memory_space<any>> -> memref<1x128xf32, #tpu.memory_space<any>>
    %c0_i32_88 = arith.constant 0 : i32
    %166 = tpu.memref_slice %arg4[%164, %c0_i32_88] : memref<16x128xf32, #tpu.memory_space<vmem>> -> memref<1x128xf32, #tpu.memory_space<vmem>>
    %167 = tpu.memref_slice %arg5[%164] : memref<16x!tpu.dma_semaphore, #tpu.memory_space<semaphore_mem>> -> memref<1x!tpu.dma_semaphore, #tpu.memory_space<semaphore_mem>>
    %168 = tpu.memref_squeeze %167 : memref<1x!tpu.dma_semaphore, #tpu.memory_space<semaphore_mem>> -> memref<!tpu.dma_semaphore, #tpu.memory_space<semaphore_mem>>
    tpu.wait_dma2 semaphore(%168 : memref<!tpu.dma_semaphore, #tpu.memory_space<semaphore_mem>>) src(%165 : memref<1x128xf32, #tpu.memory_space<any>>) dst(%166 : memref<1x128xf32, #tpu.memory_space<vmem>>)
    %c4_i32_89 = arith.constant 4 : i32
    %c1_i32_90 = arith.constant 1 : i32
    %169 = arith.muli %c4_i32_89, %c1_i32_90 : i32
    %c0_i32_91 = arith.constant 0 : i32
    %170 = arith.addi %c0_i32_91, %169 : i32
    %c0_i32_92 = arith.constant 0 : i32
    %c0_i32_93 = arith.constant 0 : i32
    %171 = tpu.memref_slice %arg2[%c0_i32_92, %c0_i32_93] : memref<64x128xf32, #tpu.memory_space<any>> -> memref<1x128xf32, #tpu.memory_space<any>>
    %c0_i32_94 = arith.constant 0 : i32
    %172 = tpu.memref_slice %arg4[%170, %c0_i32_94] : memref<16x128xf32, #tpu.memory_space<vmem>> -> memref<1x128xf32, #tpu.memory_space<vmem>>
    %173 = tpu.memref_slice %arg5[%170] : memref<16x!tpu.dma_semaphore, #tpu.memory_space<semaphore_mem>> -> memref<1x!tpu.dma_semaphore, #tpu.memory_space<semaphore_mem>>
    %174 = tpu.memref_squeeze %173 : memref<1x!tpu.dma_semaphore, #tpu.memory_space<semaphore_mem>> -> memref<!tpu.dma_semaphore, #tpu.memory_space<semaphore_mem>>
    tpu.wait_dma2 semaphore(%174 : memref<!tpu.dma_semaphore, #tpu.memory_space<semaphore_mem>>) src(%171 : memref<1x128xf32, #tpu.memory_space<any>>) dst(%172 : memref<1x128xf32, #tpu.memory_space<vmem>>)
    %c5_i32_95 = arith.constant 5 : i32
    %c1_i32_96 = arith.constant 1 : i32
    %175 = arith.muli %c5_i32_95, %c1_i32_96 : i32
    %c0_i32_97 = arith.constant 0 : i32
    %176 = arith.addi %c0_i32_97, %175 : i32
    %c0_i32_98 = arith.constant 0 : i32
    %c0_i32_99 = arith.constant 0 : i32
    %177 = tpu.memref_slice %arg2[%c0_i32_98, %c0_i32_99] : memref<64x128xf32, #tpu.memory_space<any>> -> memref<1x128xf32, #tpu.memory_space<any>>
    %c0_i32_100 = arith.constant 0 : i32
    %178 = tpu.memref_slice %arg4[%176, %c0_i32_100] : memref<16x128xf32, #tpu.memory_space<vmem>> -> memref<1x128xf32, #tpu.memory_space<vmem>>
    %179 = tpu.memref_slice %arg5[%176] : memref<16x!tpu.dma_semaphore, #tpu.memory_space<semaphore_mem>> -> memref<1x!tpu.dma_semaphore, #tpu.memory_space<semaphore_mem>>
    %180 = tpu.memref_squeeze %179 : memref<1x!tpu.dma_semaphore, #tpu.memory_space<semaphore_mem>> -> memref<!tpu.dma_semaphore, #tpu.memory_space<semaphore_mem>>
    tpu.wait_dma2 semaphore(%180 : memref<!tpu.dma_semaphore, #tpu.memory_space<semaphore_mem>>) src(%177 : memref<1x128xf32, #tpu.memory_space<any>>) dst(%178 : memref<1x128xf32, #tpu.memory_space<vmem>>)
    %c6_i32_101 = arith.constant 6 : i32
    %c1_i32_102 = arith.constant 1 : i32
    %181 = arith.muli %c6_i32_101, %c1_i32_102 : i32
    %c0_i32_103 = arith.constant 0 : i32
    %182 = arith.addi %c0_i32_103, %181 : i32
    %c0_i32_104 = arith.constant 0 : i32
    %c0_i32_105 = arith.constant 0 : i32
    %183 = tpu.memref_slice %arg2[%c0_i32_104, %c0_i32_105] : memref<64x128xf32, #tpu.memory_space<any>> -> memref<1x128xf32, #tpu.memory_space<any>>
    %c0_i32_106 = arith.constant 0 : i32
    %184 = tpu.memref_slice %arg4[%182, %c0_i32_106] : memref<16x128xf32, #tpu.memory_space<vmem>> -> memref<1x128xf32, #tpu.memory_space<vmem>>
    %185 = tpu.memref_slice %arg5[%182] : memref<16x!tpu.dma_semaphore, #tpu.memory_space<semaphore_mem>> -> memref<1x!tpu.dma_semaphore, #tpu.memory_space<semaphore_mem>>
    %186 = tpu.memref_squeeze %185 : memref<1x!tpu.dma_semaphore, #tpu.memory_space<semaphore_mem>> -> memref<!tpu.dma_semaphore, #tpu.memory_space<semaphore_mem>>
    tpu.wait_dma2 semaphore(%186 : memref<!tpu.dma_semaphore, #tpu.memory_space<semaphore_mem>>) src(%183 : memref<1x128xf32, #tpu.memory_space<any>>) dst(%184 : memref<1x128xf32, #tpu.memory_space<vmem>>)
    %c7_i32_107 = arith.constant 7 : i32
    %c1_i32_108 = arith.constant 1 : i32
    %187 = arith.muli %c7_i32_107, %c1_i32_108 : i32
    %c0_i32_109 = arith.constant 0 : i32
    %188 = arith.addi %c0_i32_109, %187 : i32
    %c0_i32_110 = arith.constant 0 : i32
    %c0_i32_111 = arith.constant 0 : i32
    %189 = tpu.memref_slice %arg2[%c0_i32_110, %c0_i32_111] : memref<64x128xf32, #tpu.memory_space<any>> -> memref<1x128xf32, #tpu.memory_space<any>>
    %c0_i32_112 = arith.constant 0 : i32
    %190 = tpu.memref_slice %arg4[%188, %c0_i32_112] : memref<16x128xf32, #tpu.memory_space<vmem>> -> memref<1x128xf32, #tpu.memory_space<vmem>>
    %191 = tpu.memref_slice %arg5[%188] : memref<16x!tpu.dma_semaphore, #tpu.memory_space<semaphore_mem>> -> memref<1x!tpu.dma_semaphore, #tpu.memory_space<semaphore_mem>>
    %192 = tpu.memref_squeeze %191 : memref<1x!tpu.dma_semaphore, #tpu.memory_space<semaphore_mem>> -> memref<!tpu.dma_semaphore, #tpu.memory_space<semaphore_mem>>
    tpu.wait_dma2 semaphore(%192 : memref<!tpu.dma_semaphore, #tpu.memory_space<semaphore_mem>>) src(%189 : memref<1x128xf32, #tpu.memory_space<any>>) dst(%190 : memref<1x128xf32, #tpu.memory_space<vmem>>)
    %c8_i32_113 = arith.constant 8 : i32
    %c1_i32_114 = arith.constant 1 : i32
    %193 = arith.muli %c8_i32_113, %c1_i32_114 : i32
    %c0_i32_115 = arith.constant 0 : i32
    %194 = arith.addi %c0_i32_115, %193 : i32
    %c0_i32_116 = arith.constant 0 : i32
    %c0_i32_117 = arith.constant 0 : i32
    %195 = tpu.memref_slice %arg2[%c0_i32_116, %c0_i32_117] : memref<64x128xf32, #tpu.memory_space<any>> -> memref<1x128xf32, #tpu.memory_space<any>>
    %c0_i32_118 = arith.constant 0 : i32
    %196 = tpu.memref_slice %arg4[%194, %c0_i32_118] : memref<16x128xf32, #tpu.memory_space<vmem>> -> memref<1x128xf32, #tpu.memory_space<vmem>>
    %197 = tpu.memref_slice %arg5[%194] : memref<16x!tpu.dma_semaphore, #tpu.memory_space<semaphore_mem>> -> memref<1x!tpu.dma_semaphore, #tpu.memory_space<semaphore_mem>>
    %198 = tpu.memref_squeeze %197 : memref<1x!tpu.dma_semaphore, #tpu.memory_space<semaphore_mem>> -> memref<!tpu.dma_semaphore, #tpu.memory_space<semaphore_mem>>
    tpu.wait_dma2 semaphore(%198 : memref<!tpu.dma_semaphore, #tpu.memory_space<semaphore_mem>>) src(%195 : memref<1x128xf32, #tpu.memory_space<any>>) dst(%196 : memref<1x128xf32, #tpu.memory_space<vmem>>)
    %c9_i32_119 = arith.constant 9 : i32
    %c1_i32_120 = arith.constant 1 : i32
    %199 = arith.muli %c9_i32_119, %c1_i32_120 : i32
    %c0_i32_121 = arith.constant 0 : i32
    %200 = arith.addi %c0_i32_121, %199 : i32
    %c0_i32_122 = arith.constant 0 : i32
    %c0_i32_123 = arith.constant 0 : i32
    %201 = tpu.memref_slice %arg2[%c0_i32_122, %c0_i32_123] : memref<64x128xf32, #tpu.memory_space<any>> -> memref<1x128xf32, #tpu.memory_space<any>>
    %c0_i32_124 = arith.constant 0 : i32
    %202 = tpu.memref_slice %arg4[%200, %c0_i32_124] : memref<16x128xf32, #tpu.memory_space<vmem>> -> memref<1x128xf32, #tpu.memory_space<vmem>>
    %203 = tpu.memref_slice %arg5[%200] : memref<16x!tpu.dma_semaphore, #tpu.memory_space<semaphore_mem>> -> memref<1x!tpu.dma_semaphore, #tpu.memory_space<semaphore_mem>>
    %204 = tpu.memref_squeeze %203 : memref<1x!tpu.dma_semaphore, #tpu.memory_space<semaphore_mem>> -> memref<!tpu.dma_semaphore, #tpu.memory_space<semaphore_mem>>
    tpu.wait_dma2 semaphore(%204 : memref<!tpu.dma_semaphore, #tpu.memory_space<semaphore_mem>>) src(%201 : memref<1x128xf32, #tpu.memory_space<any>>) dst(%202 : memref<1x128xf32, #tpu.memory_space<vmem>>)
    %c10_i32_125 = arith.constant 10 : i32
    %c1_i32_126 = arith.constant 1 : i32
    %205 = arith.muli %c10_i32_125, %c1_i32_126 : i32
    %c0_i32_127 = arith.constant 0 : i32
    %206 = arith.addi %c0_i32_127, %205 : i32
    %c0_i32_128 = arith.constant 0 : i32
    %c0_i32_129 = arith.constant 0 : i32
    %207 = tpu.memref_slice %arg2[%c0_i32_128, %c0_i32_129] : memref<64x128xf32, #tpu.memory_space<any>> -> memref<1x128xf32, #tpu.memory_space<any>>
    %c0_i32_130 = arith.constant 0 : i32
    %208 = tpu.memref_slice %arg4[%206, %c0_i32_130] : memref<16x128xf32, #tpu.memory_space<vmem>> -> memref<1x128xf32, #tpu.memory_space<vmem>>
    %209 = tpu.memref_slice %arg5[%206] : memref<16x!tpu.dma_semaphore, #tpu.memory_space<semaphore_mem>> -> memref<1x!tpu.dma_semaphore, #tpu.memory_space<semaphore_mem>>
    %210 = tpu.memref_squeeze %209 : memref<1x!tpu.dma_semaphore, #tpu.memory_space<semaphore_mem>> -> memref<!tpu.dma_semaphore, #tpu.memory_space<semaphore_mem>>
    tpu.wait_dma2 semaphore(%210 : memref<!tpu.dma_semaphore, #tpu.memory_space<semaphore_mem>>) src(%207 : memref<1x128xf32, #tpu.memory_space<any>>) dst(%208 : memref<1x128xf32, #tpu.memory_space<vmem>>)
    %c11_i32_131 = arith.constant 11 : i32
    %c1_i32_132 = arith.constant 1 : i32
    %211 = arith.muli %c11_i32_131, %c1_i32_132 : i32
    %c0_i32_133 = arith.constant 0 : i32
    %212 = arith.addi %c0_i32_133, %211 : i32
    %c0_i32_134 = arith.constant 0 : i32
    %c0_i32_135 = arith.constant 0 : i32
    %213 = tpu.memref_slice %arg2[%c0_i32_134, %c0_i32_135] : memref<64x128xf32, #tpu.memory_space<any>> -> memref<1x128xf32, #tpu.memory_space<any>>
    %c0_i32_136 = arith.constant 0 : i32
    %214 = tpu.memref_slice %arg4[%212, %c0_i32_136] : memref<16x128xf32, #tpu.memory_space<vmem>> -> memref<1x128xf32, #tpu.memory_space<vmem>>
    %215 = tpu.memref_slice %arg5[%212] : memref<16x!tpu.dma_semaphore, #tpu.memory_space<semaphore_mem>> -> memref<1x!tpu.dma_semaphore, #tpu.memory_space<semaphore_mem>>
    %216 = tpu.memref_squeeze %215 : memref<1x!tpu.dma_semaphore, #tpu.memory_space<semaphore_mem>> -> memref<!tpu.dma_semaphore, #tpu.memory_space<semaphore_mem>>
    tpu.wait_dma2 semaphore(%216 : memref<!tpu.dma_semaphore, #tpu.memory_space<semaphore_mem>>) src(%213 : memref<1x128xf32, #tpu.memory_space<any>>) dst(%214 : memref<1x128xf32, #tpu.memory_space<vmem>>)
    %c12_i32_137 = arith.constant 12 : i32
    %c1_i32_138 = arith.constant 1 : i32
    %217 = arith.muli %c12_i32_137, %c1_i32_138 : i32
    %c0_i32_139 = arith.constant 0 : i32
    %218 = arith.addi %c0_i32_139, %217 : i32
    %c0_i32_140 = arith.constant 0 : i32
    %c0_i32_141 = arith.constant 0 : i32
    %219 = tpu.memref_slice %arg2[%c0_i32_140, %c0_i32_141] : memref<64x128xf32, #tpu.memory_space<any>> -> memref<1x128xf32, #tpu.memory_space<any>>
    %c0_i32_142 = arith.constant 0 : i32
    %220 = tpu.memref_slice %arg4[%218, %c0_i32_142] : memref<16x128xf32, #tpu.memory_space<vmem>> -> memref<1x128xf32, #tpu.memory_space<vmem>>
    %221 = tpu.memref_slice %arg5[%218] : memref<16x!tpu.dma_semaphore, #tpu.memory_space<semaphore_mem>> -> memref<1x!tpu.dma_semaphore, #tpu.memory_space<semaphore_mem>>
    %222 = tpu.memref_squeeze %221 : memref<1x!tpu.dma_semaphore, #tpu.memory_space<semaphore_mem>> -> memref<!tpu.dma_semaphore, #tpu.memory_space<semaphore_mem>>
    tpu.wait_dma2 semaphore(%222 : memref<!tpu.dma_semaphore, #tpu.memory_space<semaphore_mem>>) src(%219 : memref<1x128xf32, #tpu.memory_space<any>>) dst(%220 : memref<1x128xf32, #tpu.memory_space<vmem>>)
    %c13_i32_143 = arith.constant 13 : i32
    %c1_i32_144 = arith.constant 1 : i32
    %223 = arith.muli %c13_i32_143, %c1_i32_144 : i32
    %c0_i32_145 = arith.constant 0 : i32
    %224 = arith.addi %c0_i32_145, %223 : i32
    %c0_i32_146 = arith.constant 0 : i32
    %c0_i32_147 = arith.constant 0 : i32
    %225 = tpu.memref_slice %arg2[%c0_i32_146, %c0_i32_147] : memref<64x128xf32, #tpu.memory_space<any>> -> memref<1x128xf32, #tpu.memory_space<any>>
    %c0_i32_148 = arith.constant 0 : i32
    %226 = tpu.memref_slice %arg4[%224, %c0_i32_148] : memref<16x128xf32, #tpu.memory_space<vmem>> -> memref<1x128xf32, #tpu.memory_space<vmem>>
    %227 = tpu.memref_slice %arg5[%224] : memref<16x!tpu.dma_semaphore, #tpu.memory_space<semaphore_mem>> -> memref<1x!tpu.dma_semaphore, #tpu.memory_space<semaphore_mem>>
    %228 = tpu.memref_squeeze %227 : memref<1x!tpu.dma_semaphore, #tpu.memory_space<semaphore_mem>> -> memref<!tpu.dma_semaphore, #tpu.memory_space<semaphore_mem>>
    tpu.wait_dma2 semaphore(%228 : memref<!tpu.dma_semaphore, #tpu.memory_space<semaphore_mem>>) src(%225 : memref<1x128xf32, #tpu.memory_space<any>>) dst(%226 : memref<1x128xf32, #tpu.memory_space<vmem>>)
    %c14_i32_149 = arith.constant 14 : i32
    %c1_i32_150 = arith.constant 1 : i32
    %229 = arith.muli %c14_i32_149, %c1_i32_150 : i32
    %c0_i32_151 = arith.constant 0 : i32
    %230 = arith.addi %c0_i32_151, %229 : i32
    %c0_i32_152 = arith.constant 0 : i32
    %c0_i32_153 = arith.constant 0 : i32
    %231 = tpu.memref_slice %arg2[%c0_i32_152, %c0_i32_153] : memref<64x128xf32, #tpu.memory_space<any>> -> memref<1x128xf32, #tpu.memory_space<any>>
    %c0_i32_154 = arith.constant 0 : i32
    %232 = tpu.memref_slice %arg4[%230, %c0_i32_154] : memref<16x128xf32, #tpu.memory_space<vmem>> -> memref<1x128xf32, #tpu.memory_space<vmem>>
    %233 = tpu.memref_slice %arg5[%230] : memref<16x!tpu.dma_semaphore, #tpu.memory_space<semaphore_mem>> -> memref<1x!tpu.dma_semaphore, #tpu.memory_space<semaphore_mem>>
    %234 = tpu.memref_squeeze %233 : memref<1x!tpu.dma_semaphore, #tpu.memory_space<semaphore_mem>> -> memref<!tpu.dma_semaphore, #tpu.memory_space<semaphore_mem>>
    tpu.wait_dma2 semaphore(%234 : memref<!tpu.dma_semaphore, #tpu.memory_space<semaphore_mem>>) src(%231 : memref<1x128xf32, #tpu.memory_space<any>>) dst(%232 : memref<1x128xf32, #tpu.memory_space<vmem>>)
    %c15_i32_155 = arith.constant 15 : i32
    %c1_i32_156 = arith.constant 1 : i32
    %235 = arith.muli %c15_i32_155, %c1_i32_156 : i32
    %c0_i32_157 = arith.constant 0 : i32
    %236 = arith.addi %c0_i32_157, %235 : i32
    %c0_i32_158 = arith.constant 0 : i32
    %c0_i32_159 = arith.constant 0 : i32
    %237 = tpu.memref_slice %arg2[%c0_i32_158, %c0_i32_159] : memref<64x128xf32, #tpu.memory_space<any>> -> memref<1x128xf32, #tpu.memory_space<any>>
    %c0_i32_160 = arith.constant 0 : i32
    %238 = tpu.memref_slice %arg4[%236, %c0_i32_160] : memref<16x128xf32, #tpu.memory_space<vmem>> -> memref<1x128xf32, #tpu.memory_space<vmem>>
    %239 = tpu.memref_slice %arg5[%236] : memref<16x!tpu.dma_semaphore, #tpu.memory_space<semaphore_mem>> -> memref<1x!tpu.dma_semaphore, #tpu.memory_space<semaphore_mem>>
    %240 = tpu.memref_squeeze %239 : memref<1x!tpu.dma_semaphore, #tpu.memory_space<semaphore_mem>> -> memref<!tpu.dma_semaphore, #tpu.memory_space<semaphore_mem>>
    tpu.wait_dma2 semaphore(%240 : memref<!tpu.dma_semaphore, #tpu.memory_space<semaphore_mem>>) src(%237 : memref<1x128xf32, #tpu.memory_space<any>>) dst(%238 : memref<1x128xf32, #tpu.memory_space<vmem>>)
    %c16_i32_161 = arith.constant 16 : i32
    %c0 = arith.constant 0 : index
    %c0_162 = arith.constant 0 : index
    %241 = vector.load %arg4[%c0, %c0_162] : memref<16x128xf32, #tpu.memory_space<vmem>>, vector<16x128xf32>
    %cst = arith.constant 11.3137083 : f32
    %242 = vector.broadcast %cst : f32 to vector<16x128xf32>
    %243 = arith.divf %241, %242 : vector<16x128xf32>
    %c0_163 = arith.constant 0 : index
    %c0_164 = arith.constant 0 : index
    %244 = vector.load %arg3[%c0_163, %c0_164] : memref<16x128xf32, #tpu.memory_space<vmem>>, vector<16x128xf32>
    tpu.vector_store %arg3[%c0_163, %c0_164], %243 {strides = array<i32>} : memref<16x128xf32, #tpu.memory_space<vmem>>, vector<16x128xf32>,
    return
  }
  func.func @transform_1(%arg0: i32, %arg1: memref<16xi32, #tpu.memory_space<smem>>) -> (i32, i32) {
    %c0_i32 = arith.constant 0 : i32
    %c0_i32_0 = arith.constant 0 : i32
    return %arg0, %c0_i32 : i32, i32
  }
}

</mosaic_0001>

<llo_original>
// kernel: tpu_custom_call.1
$region0: #{tpu_custom_call.1}
  #allocation0 [shape = 'u32[]', space=smem, size = 0x4, offset = 0x4, fixed_abs, tag = 'smem constant byte address 0x4 - core index']
  #allocation1 [shape = 'u32[144,128]{1,0:T(1,128)}', space=vmem, size = 0x12000, scoped, tag = 'internal scratch']
  #allocation2 [shape = 'f32[16,128]{1,0:T(8,128)}', space=vmem, size = 0x2000, scoped, tag = 'scratch operand']
  #allocation3 [shape = 's32[16]{0}', space=sflag, size = 0x40, scoped, tag = 'scratch operand']
  #allocation4 [shape = 's32[1]{0}', space=sflag, size = 0x4, scoped, tag = 'scoped memory for tpu_custom_call.1']
  #allocation5 [shape = 'u8[512]{0}', space=smem, size = 0x200, scoped, tag = 'prefetched SMEM operand 0']
  #allocation8 [shape = 's32[]', space=sflag, size = 0x4, offset = 0, fixed_abs, tag = 'sflag constant byte address 0x0 - dummy sync flag']
  #allocation9 [shape = 's32[]', space=sflag, size = 0x4, offset = 0, fixed_abs, tag = 'sflag constant byte address 0x0 - dummy sync flag']
  #allocation10 [shape = 'u32[]', space=smem, size = 0x4, offset = 0x44, fixed_abs, tag = 'smem constant byte address 0x44 - assertion arg 0']
  #allocation11 [shape = 'u32[]', space=smem, size = 0x4, offset = 0x48, fixed_abs, tag = 'smem constant byte address 0x48 - assertion arg 1']
  #allocation12 [shape = 's32[]', space=sflag, size = 0x4, offset = 0, fixed_abs, tag = 'sflag constant byte address 0x0 - dummy sync flag']
  #allocation13 [shape = 's32[]', space=sflag, size = 0x4, offset = 0, fixed_abs, tag = 'sflag constant byte address 0x0 - dummy sync flag']
  #allocation14 [shape = 's32[]', space=sflag, size = 0x4, offset = 0, fixed_abs, tag = 'sflag constant byte address 0x0 - dummy sync flag']
  #allocation15 [shape = 's32[]', space=sflag, size = 0x4, offset = 0, fixed_abs, tag = 'sflag constant byte address 0x0 - dummy sync flag']
  #allocation16 [shape = 's32[]', space=sflag, size = 0x4, offset = 0, fixed_abs, tag = 'sflag constant byte address 0x0 - dummy sync flag']
  #allocation17 [shape = 's32[]', space=sflag, size = 0x4, offset = 0, fixed_abs, tag = 'sflag constant byte address 0x0 - dummy sync flag']
  #allocation18 [shape = 's32[]', space=sflag, size = 0x4, offset = 0, fixed_abs, tag = 'sflag constant byte address 0x0 - dummy sync flag']
  #allocation19 [shape = 's32[]', space=sflag, size = 0x4, offset = 0, fixed_abs, tag = 'sflag constant byte address 0x0 - dummy sync flag']
  #allocation20 [shape = 's32[]', space=sflag, size = 0x4, offset = 0, fixed_abs, tag = 'sflag constant byte address 0x0 - dummy sync flag']
  #allocation21 [shape = 's32[]', space=sflag, size = 0x4, offset = 0, fixed_abs, tag = 'sflag constant byte address 0x0 - dummy sync flag']
  #allocation22 [shape = 's32[]', space=sflag, size = 0x4, offset = 0, fixed_abs, tag = 'sflag constant byte address 0x0 - dummy sync flag']
  #allocation23 [shape = 's32[]', space=sflag, size = 0x4, offset = 0, fixed_abs, tag = 'sflag constant byte address 0x0 - dummy sync flag']
  #allocation24 [shape = 's32[]', space=sflag, size = 0x4, offset = 0, fixed_abs, tag = 'sflag constant byte address 0x0 - dummy sync flag']
  #allocation25 [shape = 's32[]', space=sflag, size = 0x4, offset = 0, fixed_abs, tag = 'sflag constant byte address 0x0 - dummy sync flag']
  #allocation26 [shape = 's32[]', space=sflag, size = 0x4, offset = 0, fixed_abs, tag = 'sflag constant byte address 0x0 - dummy sync flag']
  #allocation27 [shape = 's32[]', space=sflag, size = 0x4, offset = 0, fixed_abs, tag = 'sflag constant byte address 0x0 - dummy sync flag']
  #allocation28 [shape = 's32[]', space=sflag, size = 0x4, offset = 0, fixed_abs, tag = 'sflag constant byte address 0x0 - dummy sync flag']
  #allocation29 [shape = 's32[]', space=sflag, size = 0x4, offset = 0, fixed_abs, tag = 'sflag constant byte address 0x0 - dummy sync flag']
  #allocation30 [shape = 's32[]', space=sflag, size = 0x4, offset = 0, fixed_abs, tag = 'sflag constant byte address 0x0 - dummy sync flag']
  #allocation31 [shape = 's32[]', space=sflag, size = 0x4, offset = 0, fixed_abs, tag = 'sflag constant byte address 0x0 - dummy sync flag']
  #allocation32 [shape = 's32[]', space=sflag, size = 0x4, offset = 0, fixed_abs, tag = 'sflag constant byte address 0x0 - dummy sync flag']
  #allocation33 [shape = 's32[]', space=sflag, size = 0x4, offset = 0, fixed_abs, tag = 'sflag constant byte address 0x0 - dummy sync flag']
  #allocation34 [shape = 's32[]', space=sflag, size = 0x4, offset = 0, fixed_abs, tag = 'sflag constant byte address 0x0 - dummy sync flag']
  #allocation35 [shape = 's32[]', space=sflag, size = 0x4, offset = 0, fixed_abs, tag = 'sflag constant byte address 0x0 - dummy sync flag']
  #allocation36 [shape = 's32[]', space=sflag, size = 0x4, offset = 0, fixed_abs, tag = 'sflag constant byte address 0x0 - dummy sync flag']
  #allocation37 [shape = 's32[]', space=sflag, size = 0x4, offset = 0, fixed_abs, tag = 'sflag constant byte address 0x0 - dummy sync flag']
  #allocation38 [shape = 's32[]', space=sflag, size = 0x4, offset = 0, fixed_abs, tag = 'sflag constant byte address 0x0 - dummy sync flag']
  #allocation39 [shape = 's32[]', space=sflag, size = 0x4, offset = 0, fixed_abs, tag = 'sflag constant byte address 0x0 - dummy sync flag']
  #allocation40 [shape = 's32[]', space=sflag, size = 0x4, offset = 0, fixed_abs, tag = 'sflag constant byte address 0x0 - dummy sync flag']
  #allocation41 [shape = 's32[]', space=sflag, size = 0x4, offset = 0, fixed_abs, tag = 'sflag constant byte address 0x0 - dummy sync flag']
  %s0 = inlined_call_operand.hbm [shape: s32[16], index: 0, kind: input, shape index: {}]
  %s1 = inlined_call_operand.hbm [shape: f32[64,128], index: 1, kind: input, shape index: {}]
  %s2 = inlined_call_operand.hbm [shape: f32[16,128], index: 2, kind: output, shape index: {}]
  %s3 = sld [smem:[#allocation0]]
  $region74: #{tpu_custom_call.1} parent=0
    _
  %s5 = ssub.s32 1, %s3
  %s6 = scalar_select 0, %s5, %s3
  %8 = dma.hbm_to_smem %s0, 16, [#allocation5], [#allocation4]
  %9 = dma.done [#allocation4], 16
  %10 = sfence
  $region1: #{tpu_custom_call.1} parent=0
    #allocation6 [shape = 'u8[8192]{0}', space=vmem, size = 0x2000, scoped, tag = 'output window, operand 0, single buffered']
    #allocation7 [shape = 's32[1]{0}', space=sflag, size = 0x4, scoped, tag = 'scoped memory for tpu_custom_call.1']
    %11 = vsyncpa [#allocation7], 0
    %s12 = smul.u32 0, 16
    %s13 = sld [smem:[#allocation5 + %s12]]
    %s14 = smul.addr %s13, 16
    %s15 = scalar_lea.hbm %s1, %s14
    // Predicated region
    $region2: #{tpu_custom_call.1} parent=1 // pred_check
      _
    $region3: #{tpu_custom_call.1} parent=1 // pred_check_branch
      %17 = sbr.rel target = $region5
    $region4: #{tpu_custom_call.1} parent=1 // pred_region
      %18 = sst [smem:[#allocation10]] [#allocation9]
      %19 = sst [smem:[#allocation11]] [#allocation8]
    $region5: #{tpu_custom_call.1} parent=1 // pred_fallthru
      _
    %21 = shalt.err (0)
    %s23 = sshll.u32 [#allocation2], 4
    %s24 = int_to_ptr.vmem [resolvable:$true] %s23
    %26 = dma.hbm_to_vmem [thread:$0]  %s15, 16, %s24, [#allocation3]
    %s27 = sadd.s32 %s12, 1
    %s28 = sld [smem:[#allocation5 + %s27]]
    %s29 = smul.addr %s28, 16
    %s30 = scalar_lea.hbm %s1, %s29
    %s31 = scalar_lea.vmem [#allocation2], 1
    %s32 = scalar_lea.sflag [#allocation3], 1
    // Predicated region
    $region6: #{tpu_custom_call.1} parent=1 // pred_check
      _
    $region7: #{tpu_custom_call.1} parent=1 // pred_check_branch
      %34 = sbr.rel target = $region9
    $region8: #{tpu_custom_call.1} parent=1 // pred_region
      %35 = sst [smem:[#allocation10]] [#allocation13]
      %36 = sst [smem:[#allocation11]] [#allocation12]
    $region9: #{tpu_custom_call.1} parent=1 // pred_fallthru
      _
    %38 = shalt.err (0)
    %s40 = sshll.u32 %s31, 4
    %s41 = int_to_ptr.vmem [resolvable:$true] %s40
    %43 = dma.hbm_to_vmem [thread:$0]  %s30, 16, %s41, %s32
    %s44 = sadd.s32 %s12, 2
    %s45 = sld [smem:[#allocation5 + %s44]]
    %s46 = smul.addr %s45, 16
    %s47 = scalar_lea.hbm %s1, %s46
    %s48 = scalar_lea.vmem [#allocation2], 2
    %s49 = scalar_lea.sflag [#allocation3], 2
    // Predicated region
    $region10: #{tpu_custom_call.1} parent=1 // pred_check
      _
    $region11: #{tpu_custom_call.1} parent=1 // pred_check_branch
      %51 = sbr.rel target = $region13
    $region12: #{tpu_custom_call.1} parent=1 // pred_region
      %52 = sst [smem:[#allocation10]] [#allocation15]
      %53 = sst [smem:[#allocation11]] [#allocation14]
    $region13: #{tpu_custom_call.1} parent=1 // pred_fallthru
      _
    %55 = shalt.err (0)
    %s57 = sshll.u32 %s48, 4
    %s58 = int_to_ptr.vmem [resolvable:$true] %s57
    %60 = dma.hbm_to_vmem [thread:$0]  %s47, 16, %s58, %s49
    %s61 = sadd.s32 %s12, 3
    %s62 = sld [smem:[#allocation5 + %s61]]
    %s63 = smul.addr %s62, 16
    %s64 = scalar_lea.hbm %s1, %s63
    %s65 = scalar_lea.vmem [#allocation2], 3
    %s66 = scalar_lea.sflag [#allocation3], 3
    // Predicated region
    $region14: #{tpu_custom_call.1} parent=1 // pred_check
      _
    $region15: #{tpu_custom_call.1} parent=1 // pred_check_branch
      %68 = sbr.rel target = $region17
    $region16: #{tpu_custom_call.1} parent=1 // pred_region
      %69 = sst [smem:[#allocation10]] [#allocation17]
      %70 = sst [smem:[#allocation11]] [#allocation16]
    $region17: #{tpu_custom_call.1} parent=1 // pred_fallthru
      _
    %72 = shalt.err (0)
    %s74 = sshll.u32 %s65, 4
    %s75 = int_to_ptr.vmem [resolvable:$true] %s74
    %77 = dma.hbm_to_vmem [thread:$0]  %s64, 16, %s75, %s66
    %s78 = sadd.s32 %s12, 4
    %s79 = sld [smem:[#allocation5 + %s78]]
    %s80 = smul.addr %s79, 16
    %s81 = scalar_lea.hbm %s1, %s80
    %s82 = scalar_lea.vmem [#allocation2], 4
    %s83 = scalar_lea.sflag [#allocation3], 4
    // Predicated region
    $region18: #{tpu_custom_call.1} parent=1 // pred_check
      _
    $region19: #{tpu_custom_call.1} parent=1 // pred_check_branch
      %85 = sbr.rel target = $region21
    $region20: #{tpu_custom_call.1} parent=1 // pred_region
      %86 = sst [smem:[#allocation10]] [#allocation19]
      %87 = sst [smem:[#allocation11]] [#allocation18]
    $region21: #{tpu_custom_call.1} parent=1 // pred_fallthru
      _
    %89 = shalt.err (0)
    %s91 = sshll.u32 %s82, 4
    %s92 = int_to_ptr.vmem [resolvable:$true] %s91
    %94 = dma.hbm_to_vmem [thread:$0]  %s81, 16, %s92, %s83
    %s95 = sadd.s32 %s12, 5
    %s96 = sld [smem:[#allocation5 + %s95]]
    %s97 = smul.addr %s96, 16
    %s98 = scalar_lea.hbm %s1, %s97
    %s99 = scalar_lea.vmem [#allocation2], 5
    %s100 = scalar_lea.sflag [#allocation3], 5
    // Predicated region
    $region22: #{tpu_custom_call.1} parent=1 // pred_check
      _
    $region23: #{tpu_custom_call.1} parent=1 // pred_check_branch
      %102 = sbr.rel target = $region25
    $region24: #{tpu_custom_call.1} parent=1 // pred_region
      %103 = sst [smem:[#allocation10]] [#allocation21]
      %104 = sst [smem:[#allocation11]] [#allocation20]
    $region25: #{tpu_custom_call.1} parent=1 // pred_fallthru
      _
    %106 = shalt.err (0)
    %s108 = sshll.u32 %s99, 4
    %s109 = int_to_ptr.vmem [resolvable:$true] %s108
    %111 = dma.hbm_to_vmem [thread:$0]  %s98, 16, %s109, %s100
    %s112 = sadd.s32 %s12, 6
    %s113 = sld [smem:[#allocation5 + %s112]]
    %s114 = smul.addr %s113, 16
    %s115 = scalar_lea.hbm %s1, %s114
    %s116 = scalar_lea.vmem [#allocation2], 6
    %s117 = scalar_lea.sflag [#allocation3], 6
    // Predicated region
    $region26: #{tpu_custom_call.1} parent=1 // pred_check
      _
    $region27: #{tpu_custom_call.1} parent=1 // pred_check_branch
      %119 = sbr.rel target = $region29
    $region28: #{tpu_custom_call.1} parent=1 // pred_region
      %120 = sst [smem:[#allocation10]] [#allocation23]
      %121 = sst [smem:[#allocation11]] [#allocation22]
    $region29: #{tpu_custom_call.1} parent=1 // pred_fallthru
      _
    %123 = shalt.err (0)
    %s125 = sshll.u32 %s116, 4
    %s126 = int_to_ptr.vmem [resolvable:$true] %s125
    %128 = dma.hbm_to_vmem [thread:$0]  %s115, 16, %s126, %s117
    %s129 = sadd.s32 %s12, 7
    %s130 = sld [smem:[#allocation5 + %s129]]
    %s131 = smul.addr %s130, 16
    %s132 = scalar_lea.hbm %s1, %s131
    %s133 = scalar_lea.vmem [#allocation2], 7
    %s134 = scalar_lea.sflag [#allocation3], 7
    // Predicated region
    $region30: #{tpu_custom_call.1} parent=1 // pred_check
      _
    $region31: #{tpu_custom_call.1} parent=1 // pred_check_branch
      %136 = sbr.rel target = $region33
    $region32: #{tpu_custom_call.1} parent=1 // pred_region
      %137 = sst [smem:[#allocation10]] [#allocation25]
      %138 = sst [smem:[#allocation11]] [#allocation24]
    $region33: #{tpu_custom_call.1} parent=1 // pred_fallthru
      _
    %140 = shalt.err (0)
    %s142 = sshll.u32 %s133, 4
    %s143 = int_to_ptr.vmem [resolvable:$true] %s142
    %145 = dma.hbm_to_vmem [thread:$0]  %s132, 16, %s143, %s134
    %s146 = sadd.s32 %s12, 8
    %s147 = sld [smem:[#allocation5 + %s146]]
    %s148 = smul.addr %s147, 16
    %s149 = scalar_lea.hbm %s1, %s148
    %s150 = scalar_lea.vmem [#allocation2], 8
    %s151 = scalar_lea.sflag [#allocation3], 8
    // Predicated region
    $region34: #{tpu_custom_call.1} parent=1 // pred_check
      _
    $region35: #{tpu_custom_call.1} parent=1 // pred_check_branch
      %153 = sbr.rel target = $region37
    $region36: #{tpu_custom_call.1} parent=1 // pred_region
      %154 = sst [smem:[#allocation10]] [#allocation27]
      %155 = sst [smem:[#allocation11]] [#allocation26]
    $region37: #{tpu_custom_call.1} parent=1 // pred_fallthru
      _
    %157 = shalt.err (0)
    %s159 = sshll.u32 %s150, 4
    %s160 = int_to_ptr.vmem [resolvable:$true] %s159
    %162 = dma.hbm_to_vmem [thread:$0]  %s149, 16, %s160, %s151
    %s163 = sadd.s32 %s12, 9
    %s164 = sld [smem:[#allocation5 + %s163]]
    %s165 = smul.addr %s164, 16
    %s166 = scalar_lea.hbm %s1, %s165
    %s167 = scalar_lea.vmem [#allocation2], 9
    %s168 = scalar_lea.sflag [#allocation3], 9
    // Predicated region
    $region38: #{tpu_custom_call.1} parent=1 // pred_check
      _
    $region39: #{tpu_custom_call.1} parent=1 // pred_check_branch
      %170 = sbr.rel target = $region41
    $region40: #{tpu_custom_call.1} parent=1 // pred_region
      %171 = sst [smem:[#allocation10]] [#allocation29]
      %172 = sst [smem:[#allocation11]] [#allocation28]
    $region41: #{tpu_custom_call.1} parent=1 // pred_fallthru
      _
    %174 = shalt.err (0)
    %s176 = sshll.u32 %s167, 4
    %s177 = int_to_ptr.vmem [resolvable:$true] %s176
    %179 = dma.hbm_to_vmem [thread:$0]  %s166, 16, %s177, %s168
    %s180 = sadd.s32 %s12, 10
    %s181 = sld [smem:[#allocation5 + %s180]]
    %s182 = smul.addr %s181, 16
    %s183 = scalar_lea.hbm %s1, %s182
    %s184 = scalar_lea.vmem [#allocation2], 10
    %s185 = scalar_lea.sflag [#allocation3], 10
    // Predicated region
    $region42: #{tpu_custom_call.1} parent=1 // pred_check
      _
    $region43: #{tpu_custom_call.1} parent=1 // pred_check_branch
      %187 = sbr.rel target = $region45
    $region44: #{tpu_custom_call.1} parent=1 // pred_region
      %188 = sst [smem:[#allocation10]] [#allocation31]
      %189 = sst [smem:[#allocation11]] [#allocation30]
    $region45: #{tpu_custom_call.1} parent=1 // pred_fallthru
      _
    %191 = shalt.err (0)
    %s193 = sshll.u32 %s184, 4
    %s194 = int_to_ptr.vmem [resolvable:$true] %s193
    %196 = dma.hbm_to_vmem [thread:$0]  %s183, 16, %s194, %s185
    %s197 = sadd.s32 %s12, 11
    %s198 = sld [smem:[#allocation5 + %s197]]
    %s199 = smul.addr %s198, 16
    %s200 = scalar_lea.hbm %s1, %s199
    %s201 = scalar_lea.vmem [#allocation2], 11
    %s202 = scalar_lea.sflag [#allocation3], 11
    // Predicated region
    $region46: #{tpu_custom_call.1} parent=1 // pred_check
      _
    $region47: #{tpu_custom_call.1} parent=1 // pred_check_branch
      %204 = sbr.rel target = $region49
    $region48: #{tpu_custom_call.1} parent=1 // pred_region
      %205 = sst [smem:[#allocation10]] [#allocation33]
      %206 = sst [smem:[#allocation11]] [#allocation32]
    $region49: #{tpu_custom_call.1} parent=1 // pred_fallthru
      _
    %208 = shalt.err (0)
    %s210 = sshll.u32 %s201, 4
    %s211 = int_to_ptr.vmem [resolvable:$true] %s210
    %213 = dma.hbm_to_vmem [thread:$0]  %s200, 16, %s211, %s202
    %s214 = sadd.s32 %s12, 12
    %s215 = sld [smem:[#allocation5 + %s214]]
    %s216 = smul.addr %s215, 16
    %s217 = scalar_lea.hbm %s1, %s216
    %s218 = scalar_lea.vmem [#allocation2], 12
    %s219 = scalar_lea.sflag [#allocation3], 12
    // Predicated region
    $region50: #{tpu_custom_call.1} parent=1 // pred_check
      _
    $region51: #{tpu_custom_call.1} parent=1 // pred_check_branch
      %221 = sbr.rel target = $region53
    $region52: #{tpu_custom_call.1} parent=1 // pred_region
      %222 = sst [smem:[#allocation10]] [#allocation35]
      %223 = sst [smem:[#allocation11]] [#allocation34]
    $region53: #{tpu_custom_call.1} parent=1 // pred_fallthru
      _
    %225 = shalt.err (0)
    %s227 = sshll.u32 %s218, 4
    %s228 = int_to_ptr.vmem [resolvable:$true] %s227
    %230 = dma.hbm_to_vmem [thread:$0]  %s217, 16, %s228, %s219
    %s231 = sadd.s32 %s12, 13
    %s232 = sld [smem:[#allocation5 + %s231]]
    %s233 = smul.addr %s232, 16
    %s234 = scalar_lea.hbm %s1, %s233
    %s235 = scalar_lea.vmem [#allocation2], 13
    %s236 = scalar_lea.sflag [#allocation3], 13
    // Predicated region
    $region54: #{tpu_custom_call.1} parent=1 // pred_check
      _
    $region55: #{tpu_custom_call.1} parent=1 // pred_check_branch
      %238 = sbr.rel target = $region57
    $region56: #{tpu_custom_call.1} parent=1 // pred_region
      %239 = sst [smem:[#allocation10]] [#allocation37]
      %240 = sst [smem:[#allocation11]] [#allocation36]
    $region57: #{tpu_custom_call.1} parent=1 // pred_fallthru
      _
    %242 = shalt.err (0)
    %s244 = sshll.u32 %s235, 4
    %s245 = int_to_ptr.vmem [resolvable:$true] %s244
    %247 = dma.hbm_to_vmem [thread:$0]  %s234, 16, %s245, %s236
    %s248 = sadd.s32 %s12, 14
    %s249 = sld [smem:[#allocation5 + %s248]]
    %s250 = smul.addr %s249, 16
    %s251 = scalar_lea.hbm %s1, %s250
    %s252 = scalar_lea.vmem [#allocation2], 14
    %s253 = scalar_lea.sflag [#allocation3], 14
    // Predicated region
    $region58: #{tpu_custom_call.1} parent=1 // pred_check
      _
    $region59: #{tpu_custom_call.1} parent=1 // pred_check_branch
      %255 = sbr.rel target = $region61
    $region60: #{tpu_custom_call.1} parent=1 // pred_region
      %256 = sst [smem:[#allocation10]] [#allocation39]
      %257 = sst [smem:[#allocation11]] [#allocation38]
    $region61: #{tpu_custom_call.1} parent=1 // pred_fallthru
      _
    %259 = shalt.err (0)
    %s261 = sshll.u32 %s252, 4
    %s262 = int_to_ptr.vmem [resolvable:$true] %s261
    %264 = dma.hbm_to_vmem [thread:$0]  %s251, 16, %s262, %s253
    %s265 = sadd.s32 %s12, 15
    %s266 = sld [smem:[#allocation5 + %s265]]
    %s267 = smul.addr %s266, 16
    %s268 = scalar_lea.hbm %s1, %s267
    %s269 = scalar_lea.vmem [#allocation2], 15
    %s270 = scalar_lea.sflag [#allocation3], 15
    // Predicated region
    $region62: #{tpu_custom_call.1} parent=1 // pred_check
      _
    $region63: #{tpu_custom_call.1} parent=1 // pred_check_branch
      %272 = sbr.rel target = $region65
    $region64: #{tpu_custom_call.1} parent=1 // pred_region
      %273 = sst [smem:[#allocation10]] [#allocation41]
      %274 = sst [smem:[#allocation11]] [#allocation40]
    $region65: #{tpu_custom_call.1} parent=1 // pred_fallthru
      _
    %276 = shalt.err (0)
    %s278 = sshll.u32 %s269, 4
    %s279 = int_to_ptr.vmem [resolvable:$true] %s278
    %281 = dma.hbm_to_vmem [thread:$0]  %s268, 16, %s279, %s270
    %s282 = smul.u32 1, 1
    %s283 = sshll.u32 %s282, 4
    %284 = dma.done [#allocation3], %s283
    %s285 = sshll.u32 %s282, 4
    %286 = dma.done %s32, %s285
    %s287 = sshll.u32 %s282, 4
    %288 = dma.done %s49, %s287
    %s289 = sshll.u32 %s282, 4
    %290 = dma.done %s66, %s289
    %s291 = sshll.u32 %s282, 4
    %292 = dma.done %s83, %s291
    %s293 = sshll.u32 %s282, 4
    %294 = dma.done %s100, %s293
    %s295 = sshll.u32 %s282, 4
    %296 = dma.done %s117, %s295
    %s297 = sshll.u32 %s282, 4
    %298 = dma.done %s134, %s297
    %s299 = sshll.u32 %s282, 4
    %300 = dma.done %s151, %s299
    %s301 = sshll.u32 %s282, 4
    %302 = dma.done %s168, %s301
    %s303 = sshll.u32 %s282, 4
    %304 = dma.done %s185, %s303
    %s305 = sshll.u32 %s282, 4
    %306 = dma.done %s202, %s305
    %s307 = sshll.u32 %s282, 4
    %308 = dma.done %s219, %s307
    %s309 = sshll.u32 %s282, 4
    %310 = dma.done %s236, %s309
    %s311 = sshll.u32 %s282, 4
    %312 = dma.done %s253, %s311
    %s313 = sshll.u32 %s282, 4
    %314 = dma.done %s270, %s313
    %v315 = vld [vmem:[#allocation2] sm:$0xff]
    %v316 = vld [vmem:[#allocation2 + $0x8] sm:$0xff]
    %v317 = vrcp.pop 11.313708
    %v318 = vmul.f32 %v315, %v317
    %v319 = vmul.f32 %v316, %v317
    %320 = vst [vmem:[#allocation6] sm:$0xff] %v318
    %321 = vst [vmem:[#allocation6 + $0x8] sm:$0xff] %v319
    // Predicated region
    $region66: #{tpu_custom_call.1} parent=1 // pred_check
      _
    $region67: #{tpu_custom_call.1} parent=1 // pred_check_branch
      %323 = sbr.rel (0) target = $region69
    $region68: #{tpu_custom_call.1} parent=1 // pred_region
      %s325 = ssub.s32 256, 256
      %326 = vsyncadd [#allocation7], %s325
      %s327 = sshll.u32 [#allocation6], 4
      %s328 = int_to_ptr.vmem [resolvable:$true] %s327
      %333 = dma.vmem_to_hbm [thread:$0]  %s328, 256, %s2, [#allocation7], 128, 128, 8
    $region69: #{tpu_custom_call.1} parent=1 // pred_fallthru
      _
    // Predicated region
    $region70: #{tpu_custom_call.1} parent=1 // pred_check
      _
    $region71: #{tpu_custom_call.1} parent=1 // pred_check_branch
      %335 = sbr.rel (0) target = $region73
    $region72: #{tpu_custom_call.1} parent=1 // pred_region
      %336 = dma.done [#allocation7], 256
    $region73: #{tpu_custom_call.1} parent=1 // pred_fallthru
      _
    %337 = vsyncpa [#allocation7], 1
  %338 = vsyncmov [#allocation3]
  %s339 = vpop.sfrf %338
  %p340 = scmp.eq.s32.totalorder %s339, 0
  %p341 = pneg %p340
  %343 = shalt.err (%p341)
  %s344 = scalar_lea.sflag [#allocation3], 1
  %345 = vsyncmov %s344
  %s346 = vpop.sfrf %345
  %p347 = scmp.eq.s32.totalorder %s346, 0
  %p348 = pneg %p347
  %350 = shalt.err (%p348)
  %s351 = scalar_lea.sflag [#allocation3], 2
  %352 = vsyncmov %s351
  %s353 = vpop.sfrf %352
  %p354 = scmp.eq.s32.totalorder %s353, 0
  %p355 = pneg %p354
  %357 = shalt.err (%p355)
  %s358 = scalar_lea.sflag [#allocation3], 3
  %359 = vsyncmov %s358
  %s360 = vpop.sfrf %359
  %p361 = scmp.eq.s32.totalorder %s360, 0
  %p362 = pneg %p361
  %364 = shalt.err (%p362)
  %s365 = scalar_lea.sflag [#allocation3], 4
  %366 = vsyncmov %s365
  %s367 = vpop.sfrf %366
  %p368 = scmp.eq.s32.totalorder %s367, 0
  %p369 = pneg %p368
  %371 = shalt.err (%p369)
  %s372 = scalar_lea.sflag [#allocation3], 5
  %373 = vsyncmov %s372
  %s374 = vpop.sfrf %373
  %p375 = scmp.eq.s32.totalorder %s374, 0
  %p376 = pneg %p375
  %378 = shalt.err (%p376)
  %s379 = scalar_lea.sflag [#allocation3], 6
  %380 = vsyncmov %s379
  %s381 = vpop.sfrf %380
  %p382 = scmp.eq.s32.totalorder %s381, 0
  %p383 = pneg %p382
  %385 = shalt.err (%p383)
  %s386 = scalar_lea.sflag [#allocation3], 7
  %387 = vsyncmov %s386
  %s388 = vpop.sfrf %387
  %p389 = scmp.eq.s32.totalorder %s388, 0
  %p390 = pneg %p389
  %392 = shalt.err (%p390)
  %s393 = scalar_lea.sflag [#allocation3], 8
  %394 = vsyncmov %s393
  %s395 = vpop.sfrf %394
  %p396 = scmp.eq.s32.totalorder %s395, 0
  %p397 = pneg %p396
  %399 = shalt.err (%p397)
  %s400 = scalar_lea.sflag [#allocation3], 9
  %401 = vsyncmov %s400
  %s402 = vpop.sfrf %401
  %p403 = scmp.eq.s32.totalorder %s402, 0
  %p404 = pneg %p403
  %406 = shalt.err (%p404)
  %s407 = scalar_lea.sflag [#allocation3], 10
  %408 = vsyncmov %s407
  %s409 = vpop.sfrf %408
  %p410 = scmp.eq.s32.totalorder %s409, 0
  %p411 = pneg %p410
  %413 = shalt.err (%p411)
  %s414 = scalar_lea.sflag [#allocation3], 11
  %415 = vsyncmov %s414
  %s416 = vpop.sfrf %415
  %p417 = scmp.eq.s32.totalorder %s416, 0
  %p418 = pneg %p417
  %420 = shalt.err (%p418)
  %s421 = scalar_lea.sflag [#allocation3], 12
  %422 = vsyncmov %s421
  %s423 = vpop.sfrf %422
  %p424 = scmp.eq.s32.totalorder %s423, 0
  %p425 = pneg %p424
  %427 = shalt.err (%p425)
  %s428 = scalar_lea.sflag [#allocation3], 13
  %429 = vsyncmov %s428
  %s430 = vpop.sfrf %429
  %p431 = scmp.eq.s32.totalorder %s430, 0
  %p432 = pneg %p431
  %434 = shalt.err (%p432)
  %s435 = scalar_lea.sflag [#allocation3], 14
  %436 = vsyncmov %s435
  %s437 = vpop.sfrf %436
  %p438 = scmp.eq.s32.totalorder %s437, 0
  %p439 = pneg %p438
  %441 = shalt.err (%p439)
  %s442 = scalar_lea.sflag [#allocation3], 15
  %443 = vsyncmov %s442
  %s444 = vpop.sfrf %443
  %p445 = scmp.eq.s32.totalorder %s444, 0
  %p446 = pneg %p445
  %448 = shalt.err (%p446)

</llo_original>
